<compile_context>
chip_gen: v7x
topology: tpu7x:2x2x1
jax: 0.10.0
libtpu: 0.0.40
codegen_flags: <defaults>
</compile_context>

<pallas_src>
import functools

import jax
import jax.numpy as jnp
from jax import lax
from jax.experimental import pallas as pl
from jax.experimental.pallas import tpu as pltpu


def _affine_kernel(x_ref, w_ref, b_ref, o_ref, acc_ref):
    """One (tm, tn) output tile; grid axis 2 loops over K (reduction)."""
    k = pl.program_id(2)

    @pl.when(k == 0)
    def _():
        # Fold the bias into the accumulator init (no separate epilogue add).
        acc_ref[...] = jnp.broadcast_to(
            b_ref[...].astype(jnp.float32), acc_ref.shape
        )

    # x: (tm, tk), w: (tn, tk) -- contract the last dim of both (weight stays
    # in its native PyTorch (N, K) layout; no wrapper-side transpose).
    acc_ref[...] += lax.dot_general(
        x_ref[...],
        w_ref[...],
        dimension_numbers=(((1,), (1,)), ((), ())),
        preferred_element_type=jnp.float32,
    )

    @pl.when(k == pl.num_programs(2) - 1)
    def _():
        o_ref[...] = acc_ref[...].astype(o_ref.dtype)


def _round_up(x, m):
    return ((x + m - 1) // m) * m


@functools.partial(jax.jit, static_argnames=("tm", "tn", "tk", "compute_dtype"))
def affine_transform(x, weight, bias, *, tm=512, tn=512, tk=512,
                     compute_dtype=None):
    """y = x @ weight.T + bias (PyTorch nn.Linear / AffineTransform forward)."""
    out_dim, in_dim = weight.shape
    lead_shape = x.shape[:-1]
    out_dtype = x.dtype

    x2d = x.reshape(-1, in_dim)
    M, K = x2d.shape
    N = out_dim

    # Optional reduced-precision operands (accumulation stays f32).
    if compute_dtype is not None:
        x2d = x2d.astype(compute_dtype)
        weight = weight.astype(compute_dtype)

    # Clamp tiles to the (padded) problem; keep (8, 128) layout alignment.
    tm = min(tm, _round_up(M, 8))
    tk = min(tk, _round_up(K, 128))
    tn = min(tn, _round_up(N, 128))

    Mp = _round_up(M, tm)
    Kp = _round_up(K, tk)
    Np = _round_up(N, tn)

    # Megacore (v7x): if the parallel grid collapsed to one (i, j) tile on a
    # problem big enough to matter, split N so both TensorCores get work.
    if Mp // tm == 1 and Np // tn == 1 and Np >= 256 and 2 * M * K * N >= (1 << 24):
        tn = max(128, (Np // 2 // 128) * 128)
        Np = _round_up(N, tn)

    # Zero-pad to tile multiples (padded K columns contribute zero; padded
    # output rows/cols are sliced away below).
    if (Mp, Kp) != (M, K):
        x2d = jnp.pad(x2d, ((0, Mp - M), (0, Kp - K)))
    w = weight
    if (Np, Kp) != (N, K):
        w = jnp.pad(w, ((0, Np - N), (0, Kp - K)))
    b = bias if Np == N else jnp.pad(bias, (0, Np - N))
    b2d = b.reshape(1, Np)

    grid = (Mp // tm, Np // tn, Kp // tk)

    in_bytes = jnp.dtype(x2d.dtype).itemsize
    out_bytes = jnp.dtype(out_dtype).itemsize
    cost = pl.CostEstimate(
        flops=2 * M * K * N,
        transcendentals=0,
        bytes_accessed=(M * K * in_bytes + N * K * in_bytes
                        + N * jnp.dtype(bias.dtype).itemsize
                        + M * N * out_bytes),
    )

    # VMEM budget: double-buffered x/w/bias/out streams + f32 accumulator.
    # Only raise the scoped limit when the 32 MiB default would not fit
    # (keeps v7x's smaller physical VMEM safe at default tile sizes).
    vmem_bytes = (2 * tm * tk * in_bytes + 2 * tn * tk * in_bytes
                  + 2 * tn * 4 + 2 * tm * tn * out_bytes + tm * tn * 4)
    compiler_kwargs = dict(
        dimension_semantics=("parallel", "parallel", "arbitrary"))
    if vmem_bytes > (28 << 20):
        compiler_kwargs["vmem_limit_bytes"] = min(int(vmem_bytes * 3 // 2),
                                                  64 << 20)

    out = pl.pallas_call(
        _affine_kernel,
        out_shape=jax.ShapeDtypeStruct((Mp, Np), out_dtype),
        grid_spec=pltpu.PrefetchScalarGridSpec(
            num_scalar_prefetch=0,
            grid=grid,
            in_specs=[
                pl.BlockSpec((tm, tk), lambda i, j, k: (i, k)),  # activations
                pl.BlockSpec((tn, tk), lambda i, j, k: (j, k)),  # weight (N,K)
                pl.BlockSpec((1, tn), lambda i, j, k: (0, j)),   # bias
            ],
            out_specs=pl.BlockSpec((tm, tn), lambda i, j, k: (i, j)),
            scratch_shapes=[pltpu.VMEM((tm, tn), jnp.float32)],
        ),
        compiler_params=pltpu.CompilerParams(**compiler_kwargs),
        cost_estimate=cost,
    )(x2d, w, b2d)

    if (Mp, Np) != (M, N):
        out = out[:M, :N]
    return out.reshape(*lead_shape, N)


if __name__ == "__main__":
    # TODO(synk): debug/dataout capture, print_model and to_kaldi_nnet are
    # host-side serialization helpers with no kernel equivalent; only the
    # forward matmul+bias is implemented here.
    k1, k2, k3, k4, k5, k6 = jax.random.split(jax.random.PRNGKey(0), 6)

    # ---- Test 1: small f32 case (grid collapses to a single step). --------
    in1, out1, batch1, seq1 = 128, 256, 2, 8
    bound1 = 1.0 / (in1 ** 0.5)
    w_a = jax.random.uniform(k1, (out1, in1), jnp.float32, -bound1, bound1)
    b_a = jax.random.uniform(k2, (out1,), jnp.float32, -bound1, bound1)
    x_a = jax.random.normal(k3, (batch1, seq1, in1), jnp.float32)

    y_a = affine_transform(x_a, w_a, b_a)
    jax.block_until_ready(y_a)
    ref_a = x_a @ w_a.T + b_a
    assert y_a.shape == (batch1, seq1, out1)
    assert jnp.allclose(y_a, ref_a, atol=1e-4, rtol=1e-4)

    # ---- Test 2: K not a tile multiple -> padding + K accumulation loop,
    #      plus the N-split path that feeds both v7x TensorCores. ----------
    in2, out2, batch2, seq2 = 640, 256, 2, 32
    bound2 = 1.0 / (in2 ** 0.5)
    w_b = jax.random.uniform(k4, (out2, in2), jnp.float32, -bound2, bound2)
    b_b = jax.random.uniform(k5, (out2,), jnp.float32, -bound2, bound2)
    x_b = jax.random.normal(k6, (batch2, seq2, in2), jnp.float32)

    y_b = affine_transform(x_b, w_b, b_b)
    jax.block_until_ready(y_b)
    ref_b = x_b @ w_b.T + b_b
    assert y_b.shape == (batch2, seq2, out2)
    assert jnp.allclose(y_b, ref_b, atol=2e-3, rtol=2e-3)

    # ---- Test 3: bf16 operands with f32 accumulation. ---------------------
    y_c = affine_transform(x_a, w_a, b_a, compute_dtype=jnp.bfloat16)
    jax.block_until_ready(y_c)
    assert jnp.allclose(y_c, ref_a, atol=5e-2, rtol=5e-2)

    print("KERNEL_OK")
</pallas_src>

<mosaic_0001>
module attributes {stable_mosaic.version = 11 : i64} {
  func.func @_affine_kernel(%arg0: i32, %arg1: i32, %arg2: i32, %arg3: memref<16x128xf32, #tpu.memory_space<vmem>>, %arg4: memref<256x128xf32, #tpu.memory_space<vmem>>, %arg5: memref<1x256xf32, #tpu.memory_space<vmem>>, %arg6: memref<16x256xf32, #tpu.memory_space<vmem>>, %arg7: memref<16x256xf32, #tpu.memory_space<vmem>>) attributes {dimension_semantics = [#tpu.dimension_semantics<parallel>, #tpu.dimension_semantics<parallel>, #tpu.dimension_semantics<arbitrary>], iteration_bounds = array<i64: 1, 1, 1>, scalar_prefetch = 0 : i64, scratch_operands = 1 : i64, tpu.core_type = #tpu.core_type<tc>, window_params = [{transform_indices = @transform_0, window_bounds = array<i64: 16, 128>}, {transform_indices = @transform_1, window_bounds = array<i64: 256, 128>}, {transform_indices = @transform_2, window_bounds = array<i64: 1, 256>}, {transform_indices = @transform_3, window_bounds = array<i64: 16, 256>}]} {
    %c0_i32 = arith.constant 0 : i32
    %0 = arith.cmpi eq, %arg2, %c0_i32 : i32
    %1 = arith.extui %0 : i1 to i32
    %c0_i32_0 = arith.constant 0 : i32
    %2 = arith.cmpi ne, %1, %c0_i32_0 : i32
    scf.if %2 {
      %c0_10 = arith.constant 0 : index
      %c0_11 = arith.constant 0 : index
      %12 = vector.load %arg5[%c0_10, %c0_11] : memref<1x256xf32, #tpu.memory_space<vmem>>, vector<1x256xf32>
      %13 = vector.shape_cast %12 : vector<1x256xf32> to vector<1x256xf32>
      %14 = vector.broadcast %13 : vector<1x256xf32> to vector<16x256xf32>
      %c0_12 = arith.constant 0 : index
      %c0_13 = arith.constant 0 : index
      %15 = vector.load %arg7[%c0_12, %c0_13] : memref<16x256xf32, #tpu.memory_space<vmem>>, vector<16x256xf32>
      tpu.vector_store %arg7[%c0_12, %c0_13], %14 {strides = array<i32>} : memref<16x256xf32, #tpu.memory_space<vmem>>, vector<16x256xf32>,
    } else {
    }
    %c0 = arith.constant 0 : index
    %c0_1 = arith.constant 0 : index
    %3 = vector.load %arg7[%c0, %c0_1] : memref<16x256xf32, #tpu.memory_space<vmem>>, vector<16x256xf32>
    %c0_2 = arith.constant 0 : index
    %c0_3 = arith.constant 0 : index
    %4 = vector.load %arg3[%c0_2, %c0_3] : memref<16x128xf32, #tpu.memory_space<vmem>>, vector<16x128xf32>
    %c0_4 = arith.constant 0 : index
    %c0_5 = arith.constant 0 : index
    %5 = vector.load %arg4[%c0_4, %c0_5] : memref<256x128xf32, #tpu.memory_space<vmem>>, vector<256x128xf32>
    %cst = arith.constant dense<0.000000e+00> : vector<16x256xf32>
    %6 = tpu.matmul %4, %5, %cst {dimension_numbers = #tpu.dot_dimension_numbers<[1], [1], [0], [0], [0, 0, 1, 0], [], []>} : vector<16x128xf32>, vector<256x128xf32>, vector<16x256xf32> -> vector<16x256xf32>
    %7 = arith.addf %3, %6 : vector<16x256xf32>
    %c0_6 = arith.constant 0 : index
    %c0_7 = arith.constant 0 : index
    %8 = vector.load %arg7[%c0_6, %c0_7] : memref<16x256xf32, #tpu.memory_space<vmem>>, vector<16x256xf32>
    tpu.vector_store %arg7[%c0_6, %c0_7], %7 {strides = array<i32>} : memref<16x256xf32, #tpu.memory_space<vmem>>, vector<16x256xf32>,
    %c0_i32_8 = arith.constant 0 : i32
    %9 = arith.cmpi eq, %arg2, %c0_i32_8 : i32
    %10 = arith.extui %9 : i1 to i32
    %c0_i32_9 = arith.constant 0 : i32
    %11 = arith.cmpi ne, %10, %c0_i32_9 : i32
    scf.if %11 {
      %c0_10 = arith.constant 0 : index
      %c0_11 = arith.constant 0 : index
      %12 = vector.load %arg7[%c0_10, %c0_11] : memref<16x256xf32, #tpu.memory_space<vmem>>, vector<16x256xf32>
      %c0_12 = arith.constant 0 : index
      %c0_13 = arith.constant 0 : index
      %13 = vector.load %arg6[%c0_12, %c0_13] : memref<16x256xf32, #tpu.memory_space<vmem>>, vector<16x256xf32>
      tpu.vector_store %arg6[%c0_12, %c0_13], %12 {strides = array<i32>} : memref<16x256xf32, #tpu.memory_space<vmem>>, vector<16x256xf32>,
    } else {
    }
    return
  }
  func.func @transform_0(%arg0: i32, %arg1: i32, %arg2: i32) -> (i32, i32) {
    %c0_i32 = arith.constant 0 : i32
    return %arg0, %arg2 : i32, i32
  }
  func.func @transform_1(%arg0: i32, %arg1: i32, %arg2: i32) -> (i32, i32) {
    %c0_i32 = arith.constant 0 : i32
    return %arg1, %arg2 : i32, i32
  }
  func.func @transform_2(%arg0: i32, %arg1: i32, %arg2: i32) -> (i32, i32) {
    %c0_i32 = arith.constant 0 : i32
    %c0_i32_0 = arith.constant 0 : i32
    return %c0_i32, %arg1 : i32, i32
  }
  func.func @transform_3(%arg0: i32, %arg1: i32, %arg2: i32) -> (i32, i32) {
    %c0_i32 = arith.constant 0 : i32
    return %arg0, %arg1 : i32, i32
  }
}

</mosaic_0001>

<llo_original>
// kernel: affine_transform.1
$region0: #{affine_transform.1}
  #allocation0 [shape = 'u32[]', space=smem, size = 0x4, offset = 0x4, fixed_abs, tag = 'smem constant byte address 0x4 - core index']
  #allocation1 [shape = 'u32[144,128]{1,0:T(1,128)}', space=vmem, size = 0x12000, scoped, tag = 'internal scratch']
  #allocation2 [shape = 'f32[16,256]{1,0:T(8,128)}', space=vmem, size = 0x4000, scoped, tag = 'scratch operand']
  %s0 = inlined_call_operand.hbm [shape: f32[16,128], index: 0, kind: input, shape index: {}]
  %s1 = inlined_call_operand.hbm [shape: f32[256,128], index: 1, kind: input, shape index: {}]
  %s2 = inlined_call_operand.vmem [shape: f32[1,256], index: 2, kind: input, shape index: {}]
  %s3 = inlined_call_operand.hbm [shape: f32[16,256], index: 3, kind: output, shape index: {}]
  %s4 = sld [smem:[#allocation0]]
  $region38: #{affine_transform.1} parent=0
    _
  %s6 = ssub.s32 1, %s4
  %s7 = scalar_select 0, %s6, %s4
  $region1: #{affine_transform.1} parent=0
    #allocation3 [shape = 'u8[8192]{0}', space=vmem, size = 0x2000, scoped, tag = 'input window, operand 0, single buffered']
    #allocation4 [shape = 's32[1]{0}', space=sflag, size = 0x4, scoped, tag = 'scoped memory for affine_transform.1']
    #allocation5 [shape = 's32[1]{0}', space=sflag, size = 0x4, scoped, tag = 'scoped memory for affine_transform.1']
    #allocation6 [shape = 'u8[131072]{0}', space=vmem, size = 0x20000, scoped, tag = 'input window, operand 1, single buffered']
    #allocation7 [shape = 's32[1]{0}', space=sflag, size = 0x4, scoped, tag = 'scoped memory for affine_transform.1']
    #allocation8 [shape = 'u8[16384]{0}', space=vmem, size = 0x4000, scoped, tag = 'output window, operand 0, single buffered']
    %8 = vsyncpa [#allocation4], 0
    %9 = vsyncpa [#allocation7], 0
    %10 = vsyncpa [#allocation5], 0
    // Predicated region
    $region2: #{affine_transform.1} parent=1 // pred_check
      _
    $region3: #{affine_transform.1} parent=1 // pred_check_branch
      %12 = sbr.rel (0) target = $region5
    $region4: #{affine_transform.1} parent=1 // pred_region
      %s14 = ssub.s32 256, 256
      %15 = vsyncadd [#allocation4], %s14
      %s16 = sshll.u32 [#allocation3], 4
      %s17 = int_to_ptr.vmem [resolvable:$true] %s16
      %22 = dma.hbm_to_vmem [thread:$0]  %s0, 256, %s17, [#allocation4], 128, 128, 8
    $region5: #{affine_transform.1} parent=1 // pred_fallthru
      _
    // Predicated region
    $region6: #{affine_transform.1} parent=1 // pred_check
      _
    $region7: #{affine_transform.1} parent=1 // pred_check_branch
      %24 = sbr.rel (0) target = $region9
    $region8: #{affine_transform.1} parent=1 // pred_region
      %s26 = ssub.s32 4096, 4096
      %27 = vsyncadd [#allocation7], %s26
      %s28 = sshll.u32 [#allocation6], 4
      %s29 = int_to_ptr.vmem [resolvable:$true] %s28
      %34 = dma.hbm_to_vmem [thread:$0]  %s1, 4096, %s29, [#allocation7], 128, 128, 8
    $region9: #{affine_transform.1} parent=1 // pred_fallthru
      _
    // Predicated region
    $region10: #{affine_transform.1} parent=1 // pred_check
      _
    $region11: #{affine_transform.1} parent=1 // pred_check_branch
      %36 = sbr.rel (0) target = $region13
    $region12: #{affine_transform.1} parent=1 // pred_region
      _
    $region13: #{affine_transform.1} parent=1 // pred_fallthru
      _
    // Predicated region
    $region14: #{affine_transform.1} parent=1 // pred_check
      _
    $region15: #{affine_transform.1} parent=1 // pred_check_branch
      %38 = sbr.rel (0) target = $region17
    $region16: #{affine_transform.1} parent=1 // pred_region
      %39 = dma.done [#allocation4], 256
    $region17: #{affine_transform.1} parent=1 // pred_fallthru
      _
    // Predicated region
    $region18: #{affine_transform.1} parent=1 // pred_check
      _
    $region19: #{affine_transform.1} parent=1 // pred_check_branch
      %41 = sbr.rel (0) target = $region21
    $region20: #{affine_transform.1} parent=1 // pred_region
      %42 = dma.done [#allocation7], 4096
    $region21: #{affine_transform.1} parent=1 // pred_fallthru
      _
    %p43 = scmp.eq.s32.totalorder 0, 0
    // Predicated region
    $region22: #{affine_transform.1} parent=1 // pred_check
      %p44 = pneg %p43
    $region23: #{affine_transform.1} parent=1 // pred_check_branch
      %46 = sbr.rel (%p44) target = $region25
    $region24: #{affine_transform.1} parent=1 // pred_region
      %v47 = vld [vmem:[%s2] sm:$0x3]
      %v49 = vlaneseq
      %v50 = vshrl.u32 %v49, 7
      %v51 = vsub.s32 0, %v50
      %v52 = vrot.slane %v47, %v51
      %v53 = vlaneseq
      %v54 = vshrl.u32 %v53, 7
      %v55 = vsub.s32 1, %v54
      %v56 = vrot.slane %v47, %v55
      %59 = vst [vmem:[#allocation2] sm:$0xff] %v52
      %60 = vst [vmem:[#allocation2 + $0x8] sm:$0xff] %v56
      %61 = vst [vmem:[#allocation2 + $0x10] sm:$0xff] %v52
      %62 = vst [vmem:[#allocation2 + $0x18] sm:$0xff] %v56
    $region25: #{affine_transform.1} parent=1 // pred_fallthru
      _
    %v63 = vld [vmem:[#allocation2] sm:$0xff]
    %v64 = vld [vmem:[#allocation2 + $0x8] sm:$0xff]
    %v65 = vld [vmem:[#allocation2 + $0x10] sm:$0xff]
    %v66 = vld [vmem:[#allocation2 + $0x18] sm:$0xff]
    %v67 = vld [vmem:[#allocation3] sm:$0xff]
    %v68 = vld [vmem:[#allocation3 + $0x8] sm:$0xff]
    %v69 = vld [vmem:[#allocation6] sm:$0xff]
    %v70 = vld [vmem:[#allocation6 + $0x8] sm:$0xff]
    %v71 = vld [vmem:[#allocation6 + $0x10] sm:$0xff]
    %v72 = vld [vmem:[#allocation6 + $0x18] sm:$0xff]
    %v73 = vld [vmem:[#allocation6 + $0x20] sm:$0xff]
    %v74 = vld [vmem:[#allocation6 + $0x28] sm:$0xff]
    %v75 = vld [vmem:[#allocation6 + $0x30] sm:$0xff]
    %v76 = vld [vmem:[#allocation6 + $0x38] sm:$0xff]
    %v77 = vld [vmem:[#allocation6 + $0x40] sm:$0xff]
    %v78 = vld [vmem:[#allocation6 + $0x48] sm:$0xff]
    %v79 = vld [vmem:[#allocation6 + $0x50] sm:$0xff]
    %v80 = vld [vmem:[#allocation6 + $0x58] sm:$0xff]
    %v81 = vld [vmem:[#allocation6 + $0x60] sm:$0xff]
    %v82 = vld [vmem:[#allocation6 + $0x68] sm:$0xff]
    %v83 = vld [vmem:[#allocation6 + $0x70] sm:$0xff]
    %v84 = vld [vmem:[#allocation6 + $0x78] sm:$0xff]
    %v85 = vld [vmem:[#allocation6 + $0x80] sm:$0xff]
    %v86 = vld [vmem:[#allocation6 + $0x88] sm:$0xff]
    %v87 = vld [vmem:[#allocation6 + $0x90] sm:$0xff]
    %v88 = vld [vmem:[#allocation6 + $0x98] sm:$0xff]
    %v89 = vld [vmem:[#allocation6 + $0xa0] sm:$0xff]
    %v90 = vld [vmem:[#allocation6 + $0xa8] sm:$0xff]
    %v91 = vld [vmem:[#allocation6 + $0xb0] sm:$0xff]
    %v92 = vld [vmem:[#allocation6 + $0xb8] sm:$0xff]
    %v93 = vld [vmem:[#allocation6 + $0xc0] sm:$0xff]
    %v94 = vld [vmem:[#allocation6 + $0xc8] sm:$0xff]
    %v95 = vld [vmem:[#allocation6 + $0xd0] sm:$0xff]
    %v96 = vld [vmem:[#allocation6 + $0xd8] sm:$0xff]
    %v97 = vld [vmem:[#allocation6 + $0xe0] sm:$0xff]
    %v98 = vld [vmem:[#allocation6 + $0xe8] sm:$0xff]
    %v99 = vld [vmem:[#allocation6 + $0xf0] sm:$0xff]
    %v100 = vld [vmem:[#allocation6 + $0xf8] sm:$0xff]
    %101 = vmatprep.subr.mxu0 0.0
    %102 = vmatpush1.xpose.msra.mxu0 %v69
    %103 = vmatprep.subr.mxu0 0.0
    %104 = vmatpush1.xpose.msra.mxu0 %v70
    %105 = vmatprep.subr.mxu0 0.0
    %106 = vmatpush1.xpose.msra.mxu0 %v71
    %107 = vmatprep.subr.mxu0 0.0
    %108 = vmatpush1.xpose.msra.mxu0 %v72
    %109 = vmatprep.subr.mxu0 0.0
    %110 = vmatpush1.xpose.msra.mxu0 %v73
    %111 = vmatprep.subr.mxu0 0.0
    %112 = vmatpush1.xpose.msra.mxu0 %v74
    %113 = vmatprep.subr.mxu0 0.0
    %114 = vmatpush1.xpose.msra.mxu0 %v75
    %115 = vmatprep.subr.mxu0 0.0
    %116 = vmatpush1.xpose.msra.mxu0 %v76
    %117 = vmatprep.subr.mxu0 0.0
    %118 = vmatpush1.xpose.msra.mxu0 %v77
    %119 = vmatprep.subr.mxu0 0.0
    %120 = vmatpush1.xpose.msra.mxu0 %v78
    %121 = vmatprep.subr.mxu0 0.0
    %122 = vmatpush1.xpose.msra.mxu0 %v79
    %123 = vmatprep.subr.mxu0 0.0
    %124 = vmatpush1.xpose.msra.mxu0 %v80
    %125 = vmatprep.subr.mxu0 0.0
    %126 = vmatpush1.xpose.msra.mxu0 %v81
    %127 = vmatprep.subr.mxu0 0.0
    %128 = vmatpush1.xpose.msra.mxu0 %v82
    %129 = vmatprep.subr.mxu0 0.0
    %130 = vmatpush1.xpose.msra.mxu0 %v83
    %131 = vmatprep.subr.mxu0 0.0
    %132 = vmatpush1.xpose.msra.mxu0 %v84
    %133 = vmatprep.subr.mxu0 0.0
    %134 = vmatpush1.xpose.msra.mxu0 %v85
    %135 = vmatprep.subr.mxu0 0.0
    %136 = vmatpush1.xpose.msra.mxu0 %v86
    %137 = vmatprep.subr.mxu0 0.0
    %138 = vmatpush1.xpose.msra.mxu0 %v87
    %139 = vmatprep.subr.mxu0 0.0
    %140 = vmatpush1.xpose.msra.mxu0 %v88
    %141 = vmatprep.subr.mxu0 0.0
    %142 = vmatpush1.xpose.msra.mxu0 %v89
    %143 = vmatprep.subr.mxu0 0.0
    %144 = vmatpush1.xpose.msra.mxu0 %v90
    %145 = vmatprep.subr.mxu0 0.0
    %146 = vmatpush1.xpose.msra.mxu0 %v91
    %147 = vmatprep.subr.mxu0 0.0
    %148 = vmatpush1.xpose.msra.mxu0 %v92
    %149 = vmatprep.subr.mxu0 0.0
    %150 = vmatpush1.xpose.msra.mxu0 %v93
    %151 = vmatprep.subr.mxu0 0.0
    %152 = vmatpush1.xpose.msra.mxu0 %v94
    %153 = vmatprep.subr.mxu0 0.0
    %154 = vmatpush1.xpose.msra.mxu0 %v95
    %155 = vmatprep.subr.mxu0 0.0
    %156 = vmatpush1.xpose.msra.mxu0 %v96
    %157 = vmatprep.subr.mxu0 0.0
    %158 = vmatpush1.xpose.msra.mxu0 %v97
    %159 = vmatprep.subr.mxu0 0.0
    %160 = vmatpush1.xpose.msra.mxu0 %v98
    %161 = vmatprep.subr.mxu0 0.0
    %162 = vmatpush1.xpose.msra.mxu0 %v99
    %163 = vmatprep.subr.mxu0 0.0
    %164 = vmatpush1.xpose.msra.mxu0 %v100
    %165 = vmatprep.mubr.f32.mxu0 0.0
    %166 = vmatmul.mubr.f32.gmra.mrb[0].mxu0 %v67
    %v167 = vpop.f32.mrb[0].mxu0
    %v168 = vadd.f32 0.0, %v167
    %v169 = vpop.f32.mrb[0].mxu0
    %v170 = vadd.f32 0.0, %v169
    %171 = vmatprep.mubr.f32.mxu0 0.0
    %172 = vmatmul.mubr.f32.gmra.mrb[0].mxu0 %v68
    %v173 = vpop.f32.mrb[0].mxu0
    %v174 = vadd.f32 0.0, %v173
    %v175 = vpop.f32.mrb[0].mxu0
    %v176 = vadd.f32 0.0, %v175
    %177 = vdwg.mxu0
    %v178 = vadd.f32 %v63, %v168
    %v179 = vadd.f32 %v64, %v170
    %v180 = vadd.f32 %v65, %v174
    %v181 = vadd.f32 %v66, %v176
    %182 = vst [vmem:[#allocation2] sm:$0xff] %v178
    %183 = vst [vmem:[#allocation2 + $0x8] sm:$0xff] %v179
    %184 = vst [vmem:[#allocation2 + $0x10] sm:$0xff] %v180
    %185 = vst [vmem:[#allocation2 + $0x18] sm:$0xff] %v181
    // Predicated region
    $region26: #{affine_transform.1} parent=1 // pred_check
      %p186 = pneg %p43
    $region27: #{affine_transform.1} parent=1 // pred_check_branch
      %188 = sbr.rel (%p186) target = $region29
    $region28: #{affine_transform.1} parent=1 // pred_region
      %v189 = vld [vmem:[#allocation2] sm:$0xff]
      %v190 = vld [vmem:[#allocation2 + $0x8] sm:$0xff]
      %v191 = vld [vmem:[#allocation2 + $0x10] sm:$0xff]
      %v192 = vld [vmem:[#allocation2 + $0x18] sm:$0xff]
      %193 = vst [vmem:[#allocation8] sm:$0xff] %v189
      %194 = vst [vmem:[#allocation8 + $0x8] sm:$0xff] %v190
      %195 = vst [vmem:[#allocation8 + $0x10] sm:$0xff] %v191
      %196 = vst [vmem:[#allocation8 + $0x18] sm:$0xff] %v192
    $region29: #{affine_transform.1} parent=1 // pred_fallthru
      _
    // Predicated region
    $region30: #{affine_transform.1} parent=1 // pred_check
      _
    $region31: #{affine_transform.1} parent=1 // pred_check_branch
      %198 = sbr.rel (0) target = $region33
    $region32: #{affine_transform.1} parent=1 // pred_region
      %s200 = ssub.s32 512, 512
      %201 = vsyncadd [#allocation5], %s200
      %s202 = sshll.u32 [#allocation8], 4
      %s203 = int_to_ptr.vmem [resolvable:$true] %s202
      %208 = dma.vmem_to_hbm [thread:$0]  %s203, 512, %s3, [#allocation5], 256, 256, 16
    $region33: #{affine_transform.1} parent=1 // pred_fallthru
      _
    // Predicated region
    $region34: #{affine_transform.1} parent=1 // pred_check
      _
    $region35: #{affine_transform.1} parent=1 // pred_check_branch
      %210 = sbr.rel (0) target = $region37
    $region36: #{affine_transform.1} parent=1 // pred_region
      %211 = dma.done [#allocation5], 512
    $region37: #{affine_transform.1} parent=1 // pred_fallthru
      _
    %212 = vsyncpa [#allocation4], 1
    %213 = vsyncpa [#allocation7], 1
    %214 = vsyncpa [#allocation5], 1

</llo_original>
